<compile_context>
chip_gen: v7x
topology: tpu7x:2x2x1
jax: 0.10.0
libtpu: 0.0.40
codegen_flags: <defaults>
</compile_context>

<pallas_src>
import functools

import jax
import jax.numpy as jnp
from jax import lax
from jax.experimental import pallas as pl
from jax.experimental.pallas import tpu as pltpu


def _round_up(x, m):
    return (x + m - 1) // m * m


def _attention_kernel(x_ref, w_ref, o_ref, *, scale):
    # x_ref: (TB, S, Hp) batch tile; w_ref: (Hp, 3*Hp) fused [Wq | Wk | Wv]; o_ref: (TB, S, Hp).
    TB, S, Hp = x_ref.shape

    x = x_ref[...]
    w = w_ref[...]

    # Single wide QKV projection over every row of the batch tile (M = TB*S, N = 3*Hp).
    # Operands keep their input dtype (bf16 stays bf16 on the MXU); accumulate in f32.
    x2d = x.reshape(TB * S, Hp)
    qkv = jnp.dot(x2d, w, preferred_element_type=jnp.float32)       # (TB*S, 3*Hp) f32
    qkv = qkv.reshape(TB, S, 3 * Hp)

    q = qkv[:, :, :Hp]            # 128-lane-aligned static slices
    k = qkv[:, :, Hp:2 * Hp]
    v = qkv[:, :, 2 * Hp:]

    # Apply the softmax scaling to whichever tensor is smaller (q: S*Hp elems, scores: S*S).
    if S > Hp:
        q = q * scale

    # scores[b, i, j] = sum_d q[b, i, d] * k[b, j, d] -- contract last dims, no k transpose.
    scores = lax.dot_general(q, k, (((2,), (2,)), ((0,), (0,))),
                             preferred_element_type=jnp.float32)    # (TB, S, S)
    if S <= Hp:
        scores = scores * scale

    # Numerically stable softmax in f32.
    m = jnp.max(scores, axis=-1, keepdims=True)
    e = jnp.exp(scores - m)
    denom = jnp.sum(e, axis=-1, keepdims=True)
    inv = pl.reciprocal(denom, approx=True)       # EUP slot, nearly free next to the exp
    inv = inv * (2.0 - denom * inv)               # one Newton step -> ~f32-accurate 1/denom
    p = e * inv                                   # (TB, S, S)

    if x.dtype == jnp.bfloat16:                   # keep the MXU in bf16 when inputs are bf16
        p = p.astype(jnp.bfloat16)
        v = v.astype(jnp.bfloat16)

    # out[b, i, d] = sum_j p[b, i, j] * v[b, j, d]
    out = lax.dot_general(p, v, (((2,), (1,)), ((0,), (0,))),
                          preferred_element_type=jnp.float32)       # (TB, S, Hp)
    o_ref[...] = out.astype(o_ref.dtype)


def attention_layer(gru_out, wq, wk, wv, *, num_batch_tiles=None):
    """gru_out: [B, S, H]; wq/wk/wv: [H, H] already laid out as x @ W. Returns [B, S, H]."""
    B, S, H = gru_out.shape
    assert wq.shape == wk.shape == wv.shape == (H, H)

    # Pad hidden dim to a lane-dense multiple of 128 (zero padding is inert for QK^T and PV).
    Hp = _round_up(H, 128)
    scale = float(H) ** -0.5      # matches PyTorch: hidden_size ** (-0.5), on the ORIGINAL H

    def pad_w(w):
        return jnp.pad(w, ((0, Hp - H), (0, Hp - H)))

    # Fused, lane-aligned QKV weight: columns [0:Hp)=Q, [Hp:2Hp)=K, [2Hp:3Hp)=V.
    w_qkv = jnp.concatenate([pad_w(wq), pad_w(wk), pad_w(wv)], axis=1)   # (Hp, 3*Hp)
    x_pad = jnp.pad(gru_out, ((0, 0), (0, 0), (0, Hp - H)))              # (B, S, Hp)

    # Batch tiling: keep >=2 parallel grid steps when possible so v7x megacore uses both cores;
    # each step still batches its QKV projection as a single M = TB*S matmul.
    if num_batch_tiles is None:
        num_batch_tiles = min(B, 2)
    num_batch_tiles = max(1, min(num_batch_tiles, B))
    while B % num_batch_tiles:
        num_batch_tiles -= 1
    TB = B // num_batch_tiles

    itemsize = jnp.dtype(gru_out.dtype).itemsize
    cost = pl.CostEstimate(
        flops=2 * B * S * Hp * 3 * Hp + 4 * B * S * S * Hp,
        transcendentals=B * S * S + B * S,
        bytes_accessed=itemsize * (2 * B * S * Hp + Hp * 3 * Hp),
    )

    kernel = functools.partial(_attention_kernel, scale=scale)

    out_pad = pl.pallas_call(
        kernel,
        out_shape=jax.ShapeDtypeStruct((B, S, Hp), gru_out.dtype),
        grid_spec=pltpu.PrefetchScalarGridSpec(
            num_scalar_prefetch=0,
            grid=(num_batch_tiles,),
            in_specs=[
                pl.BlockSpec((TB, S, Hp), lambda b: (b, 0, 0)),
                # Constant index_map: the fused weight is DMA'd once and revisited every step.
                pl.BlockSpec((Hp, 3 * Hp), lambda b: (0, 0)),
            ],
            out_specs=pl.BlockSpec((TB, S, Hp), lambda b: (b, 0, 0)),
        ),
        compiler_params=pltpu.CompilerParams(
            dimension_semantics=("parallel",)),
        cost_estimate=cost,
    )(x_pad, w_qkv)

    # Slice the lane padding back off.
    return out_pad[..., :H]


def attention_reference(gru_out, wq, wk, wv):
    """Pure-JAX reference mirroring the PyTorch forward."""
    hi = jax.lax.Precision.HIGHEST
    q = jnp.einsum("bsh,hk->bsk", gru_out, wq, precision=hi)
    k = jnp.einsum("bsh,hk->bsk", gru_out, wk, precision=hi)
    v = jnp.einsum("bsh,hk->bsk", gru_out, wv, precision=hi)
    H = gru_out.shape[-1]
    scores = jnp.einsum("bqh,bkh->bqk", q, k, precision=hi) * (H ** -0.5)
    w = jax.nn.softmax(scores, axis=-1)
    return jnp.einsum("bqk,bkh->bqh", w, v, precision=hi)


if __name__ == "__main__":
    B, S, H = 2, 8, 32

    key = jax.random.PRNGKey(0)
    k_x, k_q, k_k, k_v = jax.random.split(key, 4)

    gru_out = jax.random.normal(k_x, (B, S, H), dtype=jnp.float32)
    # PyTorch nn.Linear(H, H, bias=False) weight is [out, in]; forward is x @ W.T.
    # We initialize directly in the [in, out] (pre-transposed) layout used by the kernel.
    bound = 1.0 / (H ** 0.5)
    wq = jax.random.uniform(k_q, (H, H), jnp.float32, -bound, bound)
    wk = jax.random.uniform(k_k, (H, H), jnp.float32, -bound, bound)
    wv = jax.random.uniform(k_v, (H, H), jnp.float32, -bound, bound)

    out = attention_layer(gru_out, wq, wk, wv)
    out = jax.block_until_ready(out)

    ref = attention_reference(gru_out, wq, wk, wv)
    assert out.shape == (B, S, H)
    assert jnp.allclose(out, ref, atol=1e-5, rtol=1e-5), "mismatch vs reference"

    print("KERNEL_OK")
</pallas_src>

<mosaic_0001>
module attributes {stable_mosaic.version = 11 : i64} {
  func.func @_attention_kernel(%arg0: i32, %arg1: memref<1x8x128xf32, #tpu.memory_space<vmem>>, %arg2: memref<128x384xf32, #tpu.memory_space<vmem>>, %arg3: memref<1x8x128xf32, #tpu.memory_space<vmem>>) attributes {dimension_semantics = [#tpu.dimension_semantics<parallel>], iteration_bounds = array<i64: 2>, scalar_prefetch = 0 : i64, scratch_operands = 0 : i64, tpu.core_type = #tpu.core_type<tc>, window_params = [{transform_indices = @transform_0, window_bounds = array<i64: 1, 8, 128>}, {pipeline_mode = #tpu.pipeline_mode<synchronous>, transform_indices = @transform_1, window_bounds = array<i64: 128, 384>}, {transform_indices = @transform_2, window_bounds = array<i64: 1, 8, 128>}]} {
    %c0 = arith.constant 0 : index
    %c0_0 = arith.constant 0 : index
    %c0_1 = arith.constant 0 : index
    %0 = vector.load %arg1[%c0, %c0_0, %c0_1] : memref<1x8x128xf32, #tpu.memory_space<vmem>>, vector<1x8x128xf32>
    %c0_2 = arith.constant 0 : index
    %c0_3 = arith.constant 0 : index
    %1 = vector.load %arg2[%c0_2, %c0_3] : memref<128x384xf32, #tpu.memory_space<vmem>>, vector<128x384xf32>
    %2 = vector.shape_cast %0 : vector<1x8x128xf32> to vector<8x128xf32>
    %cst = arith.constant dense<0.000000e+00> : vector<8x384xf32>
    %3 = tpu.matmul %2, %1, %cst {dimension_numbers = #tpu.dot_dimension_numbers<[1], [0], [0], [1], [0, 0, 1, 1], [], []>} : vector<8x128xf32>, vector<128x384xf32>, vector<8x384xf32> -> vector<8x384xf32>
    %4 = vector.shape_cast %3 : vector<8x384xf32> to vector<1x8x384xf32>
    %5 = vector.extract_strided_slice %4 {offsets = [0, 0, 0], sizes = [1, 8, 128], strides = [1, 1, 1]} : vector<1x8x384xf32> to vector<1x8x128xf32>
    %6 = vector.extract_strided_slice %4 {offsets = [0, 0, 128], sizes = [1, 8, 128], strides = [1, 1, 1]} : vector<1x8x384xf32> to vector<1x8x128xf32>
    %7 = vector.extract_strided_slice %4 {offsets = [0, 0, 256], sizes = [1, 8, 128], strides = [1, 1, 1]} : vector<1x8x384xf32> to vector<1x8x128xf32>
    %cst_4 = arith.constant dense<0.000000e+00> : vector<1x8x8xf32>
    %8 = tpu.matmul %5, %6, %cst_4 {dimension_numbers = #tpu.dot_dimension_numbers<[2], [2], [1], [1], [0, 0, 0, 1, 1, 1], [0], [0]>} : vector<1x8x128xf32>, vector<1x8x128xf32>, vector<1x8x8xf32> -> vector<1x8x8xf32>
    %cst_5 = arith.constant 0.176776692 : f32
    %9 = vector.broadcast %cst_5 : f32 to vector<1x8x8xf32>
    %10 = arith.mulf %8, %9 : vector<1x8x8xf32>
    %cst_6 = arith.constant dense<0xFF800000> : vector<1x8xf32>
    %11 = vector.multi_reduction <maximumf>, %10, %cst_6 [2] : vector<1x8x8xf32> to vector<1x8xf32>
    %12 = vector.shape_cast %11 : vector<1x8xf32> to vector<1x8x1xf32>
    %13 = vector.broadcast %12 : vector<1x8x1xf32> to vector<1x8x8xf32>
    %14 = arith.subf %10, %13 : vector<1x8x8xf32>
    %15 = math.exp %14 : vector<1x8x8xf32>
    %cst_7 = arith.constant dense<0.000000e+00> : vector<1x8xf32>
    %16 = vector.multi_reduction <add>, %15, %cst_7 [2] : vector<1x8x8xf32> to vector<1x8xf32>
    %17 = vector.shape_cast %16 : vector<1x8xf32> to vector<1x8x1xf32>
    %18 = tpu.reciprocal %17 {approx = true} : vector<1x8x1xf32> -> vector<1x8x1xf32>
    %19 = arith.mulf %17, %18 : vector<1x8x1xf32>
    %cst_8 = arith.constant 2.000000e+00 : f32
    %20 = vector.broadcast %cst_8 : f32 to vector<1x8x1xf32>
    %21 = arith.subf %20, %19 : vector<1x8x1xf32>
    %22 = arith.mulf %18, %21 : vector<1x8x1xf32>
    %23 = vector.broadcast %22 : vector<1x8x1xf32> to vector<1x8x8xf32>
    %24 = arith.mulf %15, %23 : vector<1x8x8xf32>
    %cst_9 = arith.constant dense<0.000000e+00> : vector<1x8x128xf32>
    %25 = tpu.matmul %24, %7, %cst_9 {dimension_numbers = #tpu.dot_dimension_numbers<[2], [1], [1], [2], [0, 0, 0, 1, 1, 2], [0], [0]>} : vector<1x8x8xf32>, vector<1x8x128xf32>, vector<1x8x128xf32> -> vector<1x8x128xf32>
    %c0_10 = arith.constant 0 : index
    %c0_11 = arith.constant 0 : index
    %c0_12 = arith.constant 0 : index
    %26 = vector.load %arg3[%c0_10, %c0_11, %c0_12] : memref<1x8x128xf32, #tpu.memory_space<vmem>>, vector<1x8x128xf32>
    tpu.vector_store %arg3[%c0_10, %c0_11, %c0_12], %25 {strides = array<i32>} : memref<1x8x128xf32, #tpu.memory_space<vmem>>, vector<1x8x128xf32>,
    return
  }
  func.func @transform_0(%arg0: i32) -> (i32, i32, i32) {
    %c0_i32 = arith.constant 0 : i32
    %c0_i32_0 = arith.constant 0 : i32
    %c0_i32_1 = arith.constant 0 : i32
    return %arg0, %c0_i32, %c0_i32_0 : i32, i32, i32
  }
  func.func @transform_1(%arg0: i32) -> (i32, i32) {
    %c0_i32 = arith.constant 0 : i32
    %c0_i32_0 = arith.constant 0 : i32
    %c0_i32_1 = arith.constant 0 : i32
    return %c0_i32, %c0_i32_0 : i32, i32
  }
  func.func @transform_2(%arg0: i32) -> (i32, i32, i32) {
    %c0_i32 = arith.constant 0 : i32
    %c0_i32_0 = arith.constant 0 : i32
    %c0_i32_1 = arith.constant 0 : i32
    return %arg0, %c0_i32, %c0_i32_0 : i32, i32, i32
  }
}

</mosaic_0001>

<llo_original>
// kernel: tpu_custom_call.1
$region0: #{tpu_custom_call.1}
  #allocation0 [shape = 'u32[]', space=smem, size = 0x4, offset = 0x4, fixed_abs, tag = 'smem constant byte address 0x4 - core index']
  #allocation1 [shape = 'u32[144,128]{1,0:T(1,128)}', space=vmem, size = 0x12000, scoped, tag = 'internal scratch']
  %s0 = inlined_call_operand.hbm [shape: f32[2,8,128], index: 0, kind: input, shape index: {}]
  %s1 = inlined_call_operand.hbm [shape: f32[128,384], index: 1, kind: input, shape index: {}]
  %s2 = inlined_call_operand.hbm [shape: f32[2,8,128], index: 2, kind: output, shape index: {}]
  %s3 = sld [smem:[#allocation0]]
  $region49: #{tpu_custom_call.1} parent=0
    _
  %s5 = ssub.s32 1, %s3
  %s6 = scalar_select 0, %s5, %s3
  $region1: #{tpu_custom_call.1} parent=0
    #allocation2 [shape = 'u8[8192]{0}', space=vmem, size = 0x2000, scoped, tag = 'input window, operand 0']
    #allocation3 [shape = 's32[2]{0}', space=sflag, size = 0x8, scoped, tag = 'scoped memory for tpu_custom_call.1']
    #allocation4 [shape = 's32[2]{0}', space=sflag, size = 0x8, scoped, tag = 'scoped memory for tpu_custom_call.1']
    #allocation5 [shape = 'u8[196608]{0}', space=vmem, size = 0x30000, scoped, tag = 'input window, operand 1, single buffered']
    #allocation6 [shape = 's32[1]{0}', space=sflag, size = 0x4, scoped, tag = 'scoped memory for tpu_custom_call.1']
    #allocation7 [shape = 'u8[8192]{0}', space=vmem, size = 0x2000, scoped, tag = 'output window, operand 0']
    %7 = vsyncpa [#allocation3], 0
    %s8 = scalar_lea.sflag [#allocation3], 1
    %9 = vsyncpa %s8, 0
    %10 = vsyncpa [#allocation6], 0
    %11 = vsyncpa [#allocation4], 0
    %s12 = scalar_lea.sflag [#allocation4], 1
    %13 = vsyncpa %s12, 0
    loop: start=0, step=1, limit=4
    $region2: #{tpu_custom_call.1} parent=1 // loop_pre_header
      _
    $region3: #{tpu_custom_call.1} parent=1 // loop_header
      %s15 = sphi 0, %s19
      %p16 = scmp.ge.s32.totalorder %s15, 4
      %s25 = sphi 0, %s27
      %s28 = sphi 0, %s25
      %s29 = sphi 0, %s28
      %s45 = sphi 0, %s29
      %s49 = sphi 0, %s49
      %s51 = sphi 0, %s49
      %s52 = sphi 0, %s51
      %s66 = sphi 0, %s52
      %s72 = sphi 0, %s74
      %s75 = sphi 0, %s72
      %s76 = sphi 0, %s75
      %s92 = sphi 0, %s76
    $region4: #{tpu_custom_call.1} parent=1 // loop_header_branch
      %18 = sbr.rel (%p16) target = $region8
    $region5: #{tpu_custom_call.1} parent=1 // loop_body
      %s20 = ssub.s32 %s15, 1
      %s21 = ssub.s32 %s15, 2
      %s22 = sadd.s32 %s15, 1
      %s23 = ssub.s32 %s15, %s22
      %p24 = scmp.eq.s32.totalorder %s23, 0
      %s26 = sadd.s32 %s25, 1
      %s27 = scalar_select %p24, %s25, %s26
      %p30 = pneg %p24
      %p31 = scmp.eq.s32.totalorder %s15, 1
      %p32 = por %p30, %p31
      %p33 = scmp.ne.s32.totalorder %s25, %s28
      %p34 = scmp.eq.s32.totalorder %s15, 0
      %p35 = por %p33, %p34
      %p36 = scmp.ne.s32.totalorder %s25, %s28
      %p37 = scmp.eq.s32.totalorder %s20, 1
      %p38 = por %p36, %p37
      %p39 = scmp.ne.s32.totalorder %s28, %s29
      %p40 = scmp.eq.s32.totalorder %s20, 0
      %p41 = por %p39, %p40
      %p42 = scmp.ne.s32.totalorder %s28, %s29
      %p43 = scmp.eq.s32.totalorder %s21, 1
      %p44 = por %p42, %p43
      %p46 = scmp.ne.s32.totalorder %s29, %s45
      %p47 = scmp.eq.s32.totalorder %s21, 0
      %p48 = por %p46, %p47
      %s50 = sadd.s32 %s49, 1
      %p53 = scmp.eq.s32.totalorder %s15, 1
      %p54 = scmp.ne.s32.totalorder %s49, %s51
      %p55 = scmp.eq.s32.totalorder %s15, 0
      %p56 = por %p54, %p55
      %p57 = scmp.ne.s32.totalorder %s49, %s51
      %p58 = scmp.eq.s32.totalorder %s20, 1
      %p59 = por %p57, %p58
      %p60 = scmp.ne.s32.totalorder %s51, %s52
      %p61 = scmp.eq.s32.totalorder %s20, 0
      %p62 = por %p60, %p61
      %p63 = scmp.ne.s32.totalorder %s51, %s52
      %p64 = scmp.eq.s32.totalorder %s21, 1
      %p65 = por %p63, %p64
      %p67 = scmp.ne.s32.totalorder %s52, %s66
      %p68 = scmp.eq.s32.totalorder %s21, 0
      %p69 = por %p67, %p68
      %s70 = ssub.s32 %s15, %s22
      %p71 = scmp.eq.s32.totalorder %s70, 0
      %s73 = sadd.s32 %s72, 1
      %s74 = scalar_select %p71, %s72, %s73
      %p77 = pneg %p71
      %p78 = scmp.eq.s32.totalorder %s15, 1
      %p79 = por %p77, %p78
      %p80 = scmp.ne.s32.totalorder %s72, %s75
      %p81 = scmp.eq.s32.totalorder %s15, 0
      %p82 = por %p80, %p81
      %p83 = scmp.ne.s32.totalorder %s72, %s75
      %p84 = scmp.eq.s32.totalorder %s20, 1
      %p85 = por %p83, %p84
      %p86 = scmp.ne.s32.totalorder %s75, %s76
      %p87 = scmp.eq.s32.totalorder %s20, 0
      %p88 = por %p86, %p87
      %p89 = scmp.ne.s32.totalorder %s75, %s76
      %p90 = scmp.eq.s32.totalorder %s21, 1
      %p91 = por %p89, %p90
      %p93 = scmp.ne.s32.totalorder %s76, %s92
      %p94 = scmp.eq.s32.totalorder %s21, 0
      %p95 = por %p93, %p94
      %p96 = scmp.le.s32.totalorder 1, %s15
      %p97 = scmp.lt.s32.totalorder %s15, 3
      %p98 = pnand %p96, %p97
      %p99 = pneg %p98
      // Predicated region
      $region9: #{tpu_custom_call.1} parent=5 // pred_check
        _
      $region10: #{tpu_custom_call.1} parent=5 // pred_check_branch
        %101 = sbr.rel (%p98) target = $region12
      $region11: #{tpu_custom_call.1} parent=5 // pred_region
        %s102 = ssub.s32 %s15, 1
        // Predicated region
        $region13: #{tpu_custom_call.1} parent=11 // pred_check
          %p103 = pneg %p62
        $region14: #{tpu_custom_call.1} parent=11 // pred_check_branch
          %105 = sbr.rel (%p103) target = $region16
        $region15: #{tpu_custom_call.1} parent=11 // pred_region
          %s107 = ssub.s32 6144, 6144
          %108 = vsyncadd [#allocation6], %s107
          %s109 = sshll.u32 [#allocation5], 4
          %s110 = int_to_ptr.vmem [resolvable:$true] %s109
          %115 = dma.hbm_to_vmem [thread:$0]  %s1, 6144, %s110, [#allocation6], 384, 384, 24
        $region16: #{tpu_custom_call.1} parent=11 // pred_fallthru
          _
      $region12: #{tpu_custom_call.1} parent=5 // pred_fallthru
        _
      %p116 = scmp.lt.s32.totalorder %s15, 2
      // Predicated region
      $region17: #{tpu_custom_call.1} parent=5 // pred_check
        %p117 = pneg %p116
      $region18: #{tpu_custom_call.1} parent=5 // pred_check_branch
        %119 = sbr.rel (%p117) target = $region20
      $region19: #{tpu_custom_call.1} parent=5 // pred_region
        // Predicated region
        $region21: #{tpu_custom_call.1} parent=19 // pred_check
          %p120 = pneg %p35
        $region22: #{tpu_custom_call.1} parent=19 // pred_check_branch
          %122 = sbr.rel (%p120) target = $region24
        $region23: #{tpu_custom_call.1} parent=19 // pred_region
          %s123 = sand.u32 %s25, 1
          %s124 = scalar_lea.sflag [#allocation3], %s123
          %s125 = sand.u32 %s25, 1
          %s126 = smul.addr %s125, 8
          %s127 = scalar_lea.vmem [#allocation2], %s126
          %s129 = ssub.s32 128, 128
          %130 = vsyncadd %s124, %s129
          %s131 = smul.addr %s15, 128
          %s132 = scalar_lea.hbm %s0, %s131
          %s134 = sshll.u32 %s127, 4
          %s135 = int_to_ptr.vmem [resolvable:$true] %s134
          %137 = dma.hbm_to_vmem [thread:$0]  %s132, 128, %s135, %s124
        $region24: #{tpu_custom_call.1} parent=19 // pred_fallthru
          _
      $region20: #{tpu_custom_call.1} parent=5 // pred_fallthru
        _
      %p138 = scmp.le.s32.totalorder 1, %s15
      %p139 = scmp.lt.s32.totalorder %s15, 3
      %p140 = pnand %p138, %p139
      %p141 = pneg %p140
      // Predicated region
      $region25: #{tpu_custom_call.1} parent=5 // pred_check
        _
      $region26: #{tpu_custom_call.1} parent=5 // pred_check_branch
        %143 = sbr.rel (%p140) target = $region28
      $region27: #{tpu_custom_call.1} parent=5 // pred_region
        %s144 = ssub.s32 %s15, 1
        %s145 = sand.u32 %s28, 1
        %s146 = scalar_lea.sflag [#allocation3], %s145
        %s147 = sand.u32 %s28, 1
        %s148 = smul.addr %s147, 8
        %s149 = scalar_lea.vmem [#allocation2], %s148
        // Predicated region
        $region29: #{tpu_custom_call.1} parent=27 // pred_check
          %p150 = pneg %p41
        $region30: #{tpu_custom_call.1} parent=27 // pred_check_branch
          %152 = sbr.rel (%p150) target = $region32
        $region31: #{tpu_custom_call.1} parent=27 // pred_region
          %153 = dma.done %s146, 128
        $region32: #{tpu_custom_call.1} parent=27 // pred_fallthru
          _
        // Predicated region
        $region33: #{tpu_custom_call.1} parent=27 // pred_check
          %p154 = pneg %p62
        $region34: #{tpu_custom_call.1} parent=27 // pred_check_branch
          %156 = sbr.rel (%p154) target = $region36
        $region35: #{tpu_custom_call.1} parent=27 // pred_region
          %157 = dma.done [#allocation6], 6144
        $region36: #{tpu_custom_call.1} parent=27 // pred_fallthru
          _
        %s158 = sand.u32 %s28, 1
        %s159 = scalar_lea.sflag [#allocation3], %s158
        %s160 = sand.u32 %s28, 1
        %s161 = smul.addr %s160, 8
        %s162 = scalar_lea.vmem [#allocation2], %s161
        %p163 = pneg %p41
        %p164 = pneg %p38
        %p165 = pneg %p62
        %p166 = pneg %p59
        %p167 = pneg %p88
        %p168 = pneg %p85
        %s169 = sand.u32 %s75, 1
        %s170 = scalar_lea.sflag [#allocation4], %s169
        %s171 = sand.u32 %s75, 1
        %s172 = smul.addr %s171, 8
        %s173 = scalar_lea.vmem [#allocation7], %s172
        %v174 = vld [vmem:[%s149] sm:$0xff]
        %v175 = vld [vmem:[#allocation5] sm:$0xff]
        %v176 = vld [vmem:[#allocation5 + $0x8] sm:$0xff]
        %v177 = vld [vmem:[#allocation5 + $0x10] sm:$0xff]
        %v178 = vld [vmem:[#allocation5 + $0x18] sm:$0xff]
        %v179 = vld [vmem:[#allocation5 + $0x20] sm:$0xff]
        %v180 = vld [vmem:[#allocation5 + $0x28] sm:$0xff]
        %v181 = vld [vmem:[#allocation5 + $0x30] sm:$0xff]
        %v182 = vld [vmem:[#allocation5 + $0x38] sm:$0xff]
        %v183 = vld [vmem:[#allocation5 + $0x40] sm:$0xff]
        %v184 = vld [vmem:[#allocation5 + $0x48] sm:$0xff]
        %v185 = vld [vmem:[#allocation5 + $0x50] sm:$0xff]
        %v186 = vld [vmem:[#allocation5 + $0x58] sm:$0xff]
        %v187 = vld [vmem:[#allocation5 + $0x60] sm:$0xff]
        %v188 = vld [vmem:[#allocation5 + $0x68] sm:$0xff]
        %v189 = vld [vmem:[#allocation5 + $0x70] sm:$0xff]
        %v190 = vld [vmem:[#allocation5 + $0x78] sm:$0xff]
        %v191 = vld [vmem:[#allocation5 + $0x80] sm:$0xff]
        %v192 = vld [vmem:[#allocation5 + $0x88] sm:$0xff]
        %v193 = vld [vmem:[#allocation5 + $0x90] sm:$0xff]
        %v194 = vld [vmem:[#allocation5 + $0x98] sm:$0xff]
        %v195 = vld [vmem:[#allocation5 + $0xa0] sm:$0xff]
        %v196 = vld [vmem:[#allocation5 + $0xa8] sm:$0xff]
        %v197 = vld [vmem:[#allocation5 + $0xb0] sm:$0xff]
        %v198 = vld [vmem:[#allocation5 + $0xb8] sm:$0xff]
        %v199 = vld [vmem:[#allocation5 + $0xc0] sm:$0xff]
        %v200 = vld [vmem:[#allocation5 + $0xc8] sm:$0xff]
        %v201 = vld [vmem:[#allocation5 + $0xd0] sm:$0xff]
        %v202 = vld [vmem:[#allocation5 + $0xd8] sm:$0xff]
        %v203 = vld [vmem:[#allocation5 + $0xe0] sm:$0xff]
        %v204 = vld [vmem:[#allocation5 + $0xe8] sm:$0xff]
        %v205 = vld [vmem:[#allocation5 + $0xf0] sm:$0xff]
        %v206 = vld [vmem:[#allocation5 + $0xf8] sm:$0xff]
        %v207 = vld [vmem:[#allocation5 + $0x100] sm:$0xff]
        %v208 = vld [vmem:[#allocation5 + $0x108] sm:$0xff]
        %v209 = vld [vmem:[#allocation5 + $0x110] sm:$0xff]
        %v210 = vld [vmem:[#allocation5 + $0x118] sm:$0xff]
        %v211 = vld [vmem:[#allocation5 + $0x120] sm:$0xff]
        %v212 = vld [vmem:[#allocation5 + $0x128] sm:$0xff]
        %v213 = vld [vmem:[#allocation5 + $0x130] sm:$0xff]
        %v214 = vld [vmem:[#allocation5 + $0x138] sm:$0xff]
        %v215 = vld [vmem:[#allocation5 + $0x140] sm:$0xff]
        %v216 = vld [vmem:[#allocation5 + $0x148] sm:$0xff]
        %v217 = vld [vmem:[#allocation5 + $0x150] sm:$0xff]
        %v218 = vld [vmem:[#allocation5 + $0x158] sm:$0xff]
        %v219 = vld [vmem:[#allocation5 + $0x160] sm:$0xff]
        %v220 = vld [vmem:[#allocation5 + $0x168] sm:$0xff]
        %v221 = vld [vmem:[#allocation5 + $0x170] sm:$0xff]
        %v222 = vld [vmem:[#allocation5 + $0x178] sm:$0xff]
        %223 = vmatprep.subr.mxu0 %v176
        %224 = vmatpush1.msra.mxu0 %v175
        %225 = vmatprep.subr.mxu0 %v179
        %226 = vmatpush1.msra.mxu0 %v178
        %227 = vmatprep.subr.mxu0 %v182
        %228 = vmatpush1.msra.mxu0 %v181
        %229 = vmatprep.subr.mxu0 %v185
        %230 = vmatpush1.msra.mxu0 %v184
        %231 = vmatprep.subr.mxu0 %v188
        %232 = vmatpush1.msra.mxu0 %v187
        %233 = vmatprep.subr.mxu0 %v191
        %234 = vmatpush1.msra.mxu0 %v190
        %235 = vmatprep.subr.mxu0 %v194
        %236 = vmatpush1.msra.mxu0 %v193
        %237 = vmatprep.subr.mxu0 %v197
        %238 = vmatpush1.msra.mxu0 %v196
        %239 = vmatprep.subr.mxu0 %v200
        %240 = vmatpush1.msra.mxu0 %v199
        %241 = vmatprep.subr.mxu0 %v203
        %242 = vmatpush1.msra.mxu0 %v202
        %243 = vmatprep.subr.mxu0 %v206
        %244 = vmatpush1.msra.mxu0 %v205
        %245 = vmatprep.subr.mxu0 %v209
        %246 = vmatpush1.msra.mxu0 %v208
        %247 = vmatprep.subr.mxu0 %v212
        %248 = vmatpush1.msra.mxu0 %v211
        %249 = vmatprep.subr.mxu0 %v215
        %250 = vmatpush1.msra.mxu0 %v214
        %251 = vmatprep.subr.mxu0 %v218
        %252 = vmatpush1.msra.mxu0 %v217
        %253 = vmatprep.subr.mxu0 %v221
        %254 = vmatpush1.msra.mxu0 %v220
        %255 = vmatprep.subr.mxu0 0.0
        %256 = vmatpush1.msra.mxu0 0.0
        %257 = vmatprep.subr.mxu0 0.0
        %258 = vmatpush1.msra.mxu0 0.0
        %259 = vmatprep.subr.mxu0 0.0
        %260 = vmatpush1.msra.mxu0 0.0
        %261 = vmatprep.subr.mxu0 0.0
        %262 = vmatpush1.msra.mxu0 0.0
        %263 = vmatprep.subr.mxu0 0.0
        %264 = vmatpush1.msra.mxu0 0.0
        %265 = vmatprep.subr.mxu0 0.0
        %266 = vmatpush1.msra.mxu0 0.0
        %267 = vmatprep.subr.mxu0 0.0
        %268 = vmatpush1.msra.mxu0 0.0
        %269 = vmatprep.subr.mxu0 0.0
        %270 = vmatpush1.msra.mxu0 0.0
        %271 = vmatprep.subr.mxu0 0.0
        %272 = vmatpush1.msra.mxu0 0.0
        %273 = vmatprep.subr.mxu0 0.0
        %274 = vmatpush1.msra.mxu0 0.0
        %275 = vmatprep.subr.mxu0 0.0
        %276 = vmatpush1.msra.mxu0 0.0
        %277 = vmatprep.subr.mxu0 0.0
        %278 = vmatpush1.msra.mxu0 0.0
        %279 = vmatprep.subr.mxu0 0.0
        %280 = vmatpush1.msra.mxu0 0.0
        %281 = vmatprep.subr.mxu0 0.0
        %282 = vmatpush1.msra.mxu0 0.0
        %283 = vmatprep.subr.mxu0 0.0
        %284 = vmatpush1.msra.mxu0 0.0
        %285 = vmatprep.subr.mxu0 0.0
        %286 = vmatpush1.msra.mxu0 0.0
        %287 = vmatprep.mubr.f32.mxu0 0.0
        %288 = vmatmul.mubr.f32.gmra.mrb[0].mxu0 %v174
        %v289 = vpop.f32.mrb[0].mxu0
        %v290 = vadd.f32 0.0, %v289
        %v291 = vpop.f32.mrb[0].mxu0
        %v292 = vadd.f32 0.0, %v291
        %293 = vdwg.mxu0
        %294 = vmatprep.subr.mxu0 0.0
        %295 = vmatpush1.msra.mxu0 %v177
        %296 = vmatprep.subr.mxu0 0.0
        %297 = vmatpush1.msra.mxu0 %v180
        %298 = vmatprep.subr.mxu0 0.0
        %299 = vmatpush1.msra.mxu0 %v183
        %300 = vmatprep.subr.mxu0 0.0
        %301 = vmatpush1.msra.mxu0 %v186
        %302 = vmatprep.subr.mxu0 0.0
        %303 = vmatpush1.msra.mxu0 %v189
        %304 = vmatprep.subr.mxu0 0.0
        %305 = vmatpush1.msra.mxu0 %v192
        %306 = vmatprep.subr.mxu0 0.0
        %307 = vmatpush1.msra.mxu0 %v195
        %308 = vmatprep.subr.mxu0 0.0
        %309 = vmatpush1.msra.mxu0 %v198
        %310 = vmatprep.subr.mxu0 0.0
        %311 = vmatpush1.msra.mxu0 %v201
        %312 = vmatprep.subr.mxu0 0.0
        %313 = vmatpush1.msra.mxu0 %v204
        %314 = vmatprep.subr.mxu0 0.0
        %315 = vmatpush1.msra.mxu0 %v207
        %316 = vmatprep.subr.mxu0 0.0
        %317 = vmatpush1.msra.mxu0 %v210
        %318 = vmatprep.subr.mxu0 0.0
        %319 = vmatpush1.msra.mxu0 %v213
        %320 = vmatprep.subr.mxu0 0.0
        %321 = vmatpush1.msra.mxu0 %v216
        %322 = vmatprep.subr.mxu0 0.0
        %323 = vmatpush1.msra.mxu0 %v219
        %324 = vmatprep.subr.mxu0 0.0
        %325 = vmatpush1.msra.mxu0 %v222
        %326 = vmatprep.subr.mxu0 0.0
        %327 = vmatpush1.msra.mxu0 0.0
        %328 = vmatprep.subr.mxu0 0.0
        %329 = vmatpush1.msra.mxu0 0.0
        %330 = vmatprep.subr.mxu0 0.0
        %331 = vmatpush1.msra.mxu0 0.0
        %332 = vmatprep.subr.mxu0 0.0
        %333 = vmatpush1.msra.mxu0 0.0
        %334 = vmatprep.subr.mxu0 0.0
        %335 = vmatpush1.msra.mxu0 0.0
        %336 = vmatprep.subr.mxu0 0.0
        %337 = vmatpush1.msra.mxu0 0.0
        %338 = vmatprep.subr.mxu0 0.0
        %339 = vmatpush1.msra.mxu0 0.0
        %340 = vmatprep.subr.mxu0 0.0
        %341 = vmatpush1.msra.mxu0 0.0
        %342 = vmatprep.subr.mxu0 0.0
        %343 = vmatpush1.msra.mxu0 0.0
        %344 = vmatprep.subr.mxu0 0.0
        %345 = vmatpush1.msra.mxu0 0.0
        %346 = vmatprep.subr.mxu0 0.0
        %347 = vmatpush1.msra.mxu0 0.0
        %348 = vmatprep.subr.mxu0 0.0
        %349 = vmatpush1.msra.mxu0 0.0
        %350 = vmatprep.subr.mxu0 0.0
        %351 = vmatpush1.msra.mxu0 0.0
        %352 = vmatprep.subr.mxu0 0.0
        %353 = vmatpush1.msra.mxu0 0.0
        %354 = vmatprep.subr.mxu0 0.0
        %355 = vmatpush1.msra.mxu0 0.0
        %356 = vmatprep.subr.mxu0 0.0
        %357 = vmatpush1.msra.mxu0 0.0
        %358 = vmatprep.mubr.f32.mxu0 0.0
        %359 = vmatmul.mubr.f32.gmra.mrb[0].mxu0 %v174
        %v360 = vpop.f32.mrb[0].mxu0
        %v361 = vadd.f32 0.0, %v360
        %v362 = vpop.f32.mrb[0].mxu0
        %363 = vdwg.mxu0
        %364 = vmatprep.subr.mxu0 0.0
        %365 = vmatpush1.xpose.msra.mxu0 %v292
        %366 = vmatprep.subr.mxu0 0.0
        %367 = vmatpush1.xpose.msra.mxu0 0.0
        %368 = vmatprep.subr.mxu0 0.0
        %369 = vmatpush1.xpose.msra.mxu0 0.0
        %370 = vmatprep.subr.mxu0 0.0
        %371 = vmatpush1.xpose.msra.mxu0 0.0
        %372 = vmatprep.subr.mxu0 0.0
        %373 = vmatpush1.xpose.msra.mxu0 0.0
        %374 = vmatprep.subr.mxu0 0.0
        %375 = vmatpush1.xpose.msra.mxu0 0.0
        %376 = vmatprep.subr.mxu0 0.0
        %377 = vmatpush1.xpose.msra.mxu0 0.0
        %378 = vmatprep.subr.mxu0 0.0
        %379 = vmatpush1.xpose.msra.mxu0 0.0
        %380 = vmatprep.subr.mxu0 0.0
        %381 = vmatpush1.xpose.msra.mxu0 0.0
        %382 = vmatprep.subr.mxu0 0.0
        %383 = vmatpush1.xpose.msra.mxu0 0.0
        %384 = vmatprep.subr.mxu0 0.0
        %385 = vmatpush1.xpose.msra.mxu0 0.0
        %386 = vmatprep.subr.mxu0 0.0
        %387 = vmatpush1.xpose.msra.mxu0 0.0
        %388 = vmatprep.subr.mxu0 0.0
        %389 = vmatpush1.xpose.msra.mxu0 0.0
        %390 = vmatprep.subr.mxu0 0.0
        %391 = vmatpush1.xpose.msra.mxu0 0.0
        %392 = vmatprep.subr.mxu0 0.0
        %393 = vmatpush1.xpose.msra.mxu0 0.0
        %394 = vmatprep.subr.mxu0 0.0
        %395 = vmatpush1.xpose.msra.mxu0 0.0
        %396 = vmatprep.subr.mxu0 0.0
        %397 = vmatpush1.xpose.msra.mxu0 0.0
        %398 = vmatprep.subr.mxu0 0.0
        %399 = vmatpush1.xpose.msra.mxu0 0.0
        %400 = vmatprep.subr.mxu0 0.0
        %401 = vmatpush1.xpose.msra.mxu0 0.0
        %402 = vmatprep.subr.mxu0 0.0
        %403 = vmatpush1.xpose.msra.mxu0 0.0
        %404 = vmatprep.subr.mxu0 0.0
        %405 = vmatpush1.xpose.msra.mxu0 0.0
        %406 = vmatprep.subr.mxu0 0.0
        %407 = vmatpush1.xpose.msra.mxu0 0.0
        %408 = vmatprep.subr.mxu0 0.0
        %409 = vmatpush1.xpose.msra.mxu0 0.0
        %410 = vmatprep.subr.mxu0 0.0
        %411 = vmatpush1.xpose.msra.mxu0 0.0
        %412 = vmatprep.subr.mxu0 0.0
        %413 = vmatpush1.xpose.msra.mxu0 0.0
        %414 = vmatprep.subr.mxu0 0.0
        %415 = vmatpush1.xpose.msra.mxu0 0.0
        %416 = vmatprep.subr.mxu0 0.0
        %417 = vmatpush1.xpose.msra.mxu0 0.0
        %418 = vmatprep.subr.mxu0 0.0
        %419 = vmatpush1.xpose.msra.mxu0 0.0
        %420 = vmatprep.subr.mxu0 0.0
        %421 = vmatpush1.xpose.msra.mxu0 0.0
        %422 = vmatprep.subr.mxu0 0.0
        %423 = vmatpush1.xpose.msra.mxu0 0.0
        %424 = vmatprep.subr.mxu0 0.0
        %425 = vmatpush1.xpose.msra.mxu0 0.0
        %426 = vmatprep.subr.mxu0 0.0
        %427 = vmatpush1.xpose.msra.mxu0 0.0
        %428 = vmatprep.mubr.f32.mxu0 0.0
        %429 = vmatmul.mubr.f32.gmra.mrb[0].mxu0 %v290
        %v430 = vpop.f32.mrb[0].mxu0
        %v431 = vadd.f32 0.0, %v430
        %v432 = vpop.f32.mrb[0].mxu0
        %433 = vdwg.mxu0
        %v434 = vmul.f32 %v431, 0.17677669
        %vm435 = vcmask 64512
        %v436 = vsel %vm435, %v434, -inf
        %437 = vmax.xlane.f32.xlu0 %v436
        %v438 = vpop.xlane.xlu0 %437
        %v439 = vsub.f32 %v434, %v438
        %v440 = vmul.f32 %v439, 1.442695
        %v441 = vpow.pop %v440
        %v442 = vsel %vm435, %v441, 0.0
        %443 = vadd.xlane.f32.xlu0 %v442
        %v444 = vpop.xlane.xlu0 %443
        %v445 = vrcp.pop %v444
        %v446 = vmul.f32 %v444, %v445
        %v447 = vsub.f32 2.0, %v446
        %v448 = vmul.f32 %v445, %v447
        %v449 = vmul.f32 %v441, %v448
        %v451 = vsel %vm435, %v449, 0
        %453 = vmatprep.subr.mxu0 0.0
        %454 = vmatpush1.msra.mxu0 %v361
        %455 = vmatprep.subr.mxu0 0.0
        %456 = vmatpush1.msra.mxu0 0.0
        %457 = vmatprep.subr.mxu0 0.0
        %458 = vmatpush1.msra.mxu0 0.0
        %459 = vmatprep.subr.mxu0 0.0
        %460 = vmatpush1.msra.mxu0 0.0
        %461 = vmatprep.subr.mxu0 0.0
        %462 = vmatpush1.msra.mxu0 0.0
        %463 = vmatprep.subr.mxu0 0.0
        %464 = vmatpush1.msra.mxu0 0.0
        %465 = vmatprep.subr.mxu0 0.0
        %466 = vmatpush1.msra.mxu0 0.0
        %467 = vmatprep.subr.mxu0 0.0
        %468 = vmatpush1.msra.mxu0 0.0
        %469 = vmatprep.subr.mxu0 0.0
        %470 = vmatpush1.msra.mxu0 0.0
        %471 = vmatprep.subr.mxu0 0.0
        %472 = vmatpush1.msra.mxu0 0.0
        %473 = vmatprep.subr.mxu0 0.0
        %474 = vmatpush1.msra.mxu0 0.0
        %475 = vmatprep.subr.mxu0 0.0
        %476 = vmatpush1.msra.mxu0 0.0
        %477 = vmatprep.subr.mxu0 0.0
        %478 = vmatpush1.msra.mxu0 0.0
        %479 = vmatprep.subr.mxu0 0.0
        %480 = vmatpush1.msra.mxu0 0.0
        %481 = vmatprep.subr.mxu0 0.0
        %482 = vmatpush1.msra.mxu0 0.0
        %483 = vmatprep.subr.mxu0 0.0
        %484 = vmatpush1.msra.mxu0 0.0
        %485 = vmatprep.subr.mxu0 0.0
        %486 = vmatpush1.msra.mxu0 0.0
        %487 = vmatprep.subr.mxu0 0.0
        %488 = vmatpush1.msra.mxu0 0.0
        %489 = vmatprep.subr.mxu0 0.0
        %490 = vmatpush1.msra.mxu0 0.0
        %491 = vmatprep.subr.mxu0 0.0
        %492 = vmatpush1.msra.mxu0 0.0
        %493 = vmatprep.subr.mxu0 0.0
        %494 = vmatpush1.msra.mxu0 0.0
        %495 = vmatprep.subr.mxu0 0.0
        %496 = vmatpush1.msra.mxu0 0.0
        %497 = vmatprep.subr.mxu0 0.0
        %498 = vmatpush1.msra.mxu0 0.0
        %499 = vmatprep.subr.mxu0 0.0
        %500 = vmatpush1.msra.mxu0 0.0
        %501 = vmatprep.subr.mxu0 0.0
        %502 = vmatpush1.msra.mxu0 0.0
        %503 = vmatprep.subr.mxu0 0.0
        %504 = vmatpush1.msra.mxu0 0.0
        %505 = vmatprep.subr.mxu0 0.0
        %506 = vmatpush1.msra.mxu0 0.0
        %507 = vmatprep.subr.mxu0 0.0
        %508 = vmatpush1.msra.mxu0 0.0
        %509 = vmatprep.subr.mxu0 0.0
        %510 = vmatpush1.msra.mxu0 0.0
        %511 = vmatprep.subr.mxu0 0.0
        %512 = vmatpush1.msra.mxu0 0.0
        %513 = vmatprep.subr.mxu0 0.0
        %514 = vmatpush1.msra.mxu0 0.0
        %515 = vmatprep.subr.mxu0 0.0
        %516 = vmatpush1.msra.mxu0 0.0
        %517 = vmatprep.mubr.f32.mxu0 0.0
        %518 = vmatmul.mubr.f32.gmra.mrb[0].mxu0 %v451
        %v519 = vpop.f32.mrb[0].mxu0
        %v520 = vadd.f32 0.0, %v519
        %v521 = vpop.f32.mrb[0].mxu0
        %522 = vdwg.mxu0
        %523 = vst [vmem:[%s173] sm:$0xff] %v520
        %s524 = sand.u32 %s75, 1
        %s525 = scalar_lea.sflag [#allocation4], %s524
        %s526 = sand.u32 %s75, 1
        %s527 = smul.addr %s526, 8
        %s528 = scalar_lea.vmem [#allocation7], %s527
        // Predicated region
        $region37: #{tpu_custom_call.1} parent=27 // pred_check
          %p529 = pneg %p85
        $region38: #{tpu_custom_call.1} parent=27 // pred_check_branch
          %531 = sbr.rel (%p529) target = $region40
        $region39: #{tpu_custom_call.1} parent=27 // pred_region
          %s533 = ssub.s32 128, 128
          %534 = vsyncadd %s525, %s533
          %s535 = smul.addr %s20, 128
          %s536 = scalar_lea.hbm %s2, %s535
          %s538 = sshll.u32 %s528, 4
          %s539 = int_to_ptr.vmem [resolvable:$true] %s538
          %541 = dma.vmem_to_hbm [thread:$0]  %s539, 128, %s536, %s525
        $region40: #{tpu_custom_call.1} parent=27 // pred_fallthru
          _
      $region28: #{tpu_custom_call.1} parent=5 // pred_fallthru
        _
      %p542 = scmp.le.s32.totalorder 2, %s15
      // Predicated region
      $region41: #{tpu_custom_call.1} parent=5 // pred_check
        %p543 = pneg %p542
      $region42: #{tpu_custom_call.1} parent=5 // pred_check_branch
        %545 = sbr.rel (%p543) target = $region44
      $region43: #{tpu_custom_call.1} parent=5 // pred_region
        %s546 = ssub.s32 %s15, 2
        // Predicated region
        $region45: #{tpu_custom_call.1} parent=43 // pred_check
          %p547 = pneg %p91
        $region46: #{tpu_custom_call.1} parent=43 // pred_check_branch
          %549 = sbr.rel (%p547) target = $region48
        $region47: #{tpu_custom_call.1} parent=43 // pred_region
          %s550 = sand.u32 %s76, 1
          %s551 = scalar_lea.sflag [#allocation4], %s550
          %s552 = sand.u32 %s76, 1
          %s553 = smul.addr %s552, 8
          %s554 = scalar_lea.vmem [#allocation7], %s553
          %555 = dma.done %s551, 128
        $region48: #{tpu_custom_call.1} parent=43 // pred_fallthru
          _
      $region44: #{tpu_custom_call.1} parent=5 // pred_fallthru
        _
    $region6: #{tpu_custom_call.1} parent=1 // loop_footer
      %s19 = sadd.s32 1, %s15
    $region7: #{tpu_custom_call.1} parent=1 // loop_footer_branch
      %14 = sbr.rel target = $region3
    $region8: #{tpu_custom_call.1} parent=1 // loop_exit
      _
    %556 = vsyncpa [#allocation3], 1
    %s557 = scalar_lea.sflag [#allocation3], 1
    %558 = vsyncpa %s557, 1
    %559 = vsyncpa [#allocation6], 1
    %560 = vsyncpa [#allocation4], 1
    %s561 = scalar_lea.sflag [#allocation4], 1
    %562 = vsyncpa %s561, 1

</llo_original>
